<compile_context>
chip_gen: v6e
topology: v6e:2x2x1
jax: 0.10.0
libtpu: 0.0.40
codegen_flags: <defaults>
</compile_context>

<pallas_src>
import jax
import jax.numpy as jnp
from jax.experimental import pallas as pl
from jax.experimental.pallas import tpu as pltpu

LANE = 128


# ------------------------------- the kernel ---------------------------------

def _final_layer_kernel(x_ref, shift_ref, scale_ref, w_ref, b_ref, o_ref):
    """One (batch, seq-tile) grid step: LayerNorm -> modulate -> fused Linear."""
    x = x_ref[...]                           # (block_n, D)
    shift = shift_ref[...]                   # (1, D)  -- per-batch row
    scale = scale_ref[...]                   # (1, D)

    # LayerNorm (elementwise_affine=False, eps=1e-6), single-pass statistics.
    mu = jnp.mean(x, axis=-1, keepdims=True)
    ex2 = jnp.mean(x * x, axis=-1, keepdims=True)
    var = ex2 - mu * mu
    xn = (x - mu) * jax.lax.rsqrt(var + 1e-6)

    # adaLN modulation (shift/scale precomputed per batch on the host).
    xm = xn * (1.0 + scale) + shift          # (1, D) broadcasts over rows

    # Fused projection: Linear(D,32) @ Linear(32,C)  ==  one Linear(D, C_pad).
    o = jnp.dot(xm, w_ref[...], preferred_element_type=jnp.float32) + b_ref[...]
    o_ref[...] = o.astype(o_ref.dtype)       # (block_n, C_pad) lane-dense store


# -------------------------------- wrapper ------------------------------------

def final_layer(x, c, params, *, block_n=None):
    B, N, D = x.shape
    C = params["w2"].shape[1]
    dt = x.dtype

    # ---- host-side prep (tiny work, keeps the kernel body lean) ------------
    # adaLN modulation: shift/scale per batch element (O(B*D^2) -> plain XLA).
    c_silu = c * jax.nn.sigmoid(c)
    ada = jnp.dot(c_silu, params["w_ada"]) + params["b_ada"]      # (B, 2D)
    shift = ada[:, :D].reshape(B, 1, D).astype(dt)
    scale = ada[:, D:].reshape(B, 1, D).astype(dt)

    # Fuse the two projections and pad the output features to a full lane
    # group so the kernel's store is unmasked (lane-dense).
    w_fused = jnp.dot(params["w1"], params["w2"])                 # (D, C)
    b_fused = jnp.dot(params["b1"], params["w2"]) + params["b2"]  # (1, C)
    C_pad = max(LANE, ((C + LANE - 1) // LANE) * LANE)
    w_fused = jnp.pad(w_fused, ((0, 0), (0, C_pad - C))).astype(jnp.float32)
    b_fused = jnp.pad(b_fused, ((0, 0), (0, C_pad - C))).astype(jnp.float32)

    # ---- tiling -------------------------------------------------------------
    if block_n is None:
        block_n = min(512, N)
    if block_n != N:                       # keep sublane dim a multiple of 8
        block_n = max(8, (min(block_n, N) // 8) * 8)
    grid = (B, pl.cdiv(N, block_n))

    # VMEM budget: double-buffered x/out tiles + shift/scale + fused weights.
    fs = 4  # f32 itemsize
    est = fs * (2 * block_n * D                # x tiles (double buffered)
                + 2 * block_n * C_pad          # out tiles
                + 2 * 2 * 8 * D                # shift + scale (sublane-padded)
                + 2 * (D * C_pad + C_pad))     # fused weight + bias
    vmem_limit = int(min(96 << 20, max(16 << 20, 4 * est)))

    out_padded = pl.pallas_call(
        _final_layer_kernel,
        out_shape=jax.ShapeDtypeStruct((B, N, C_pad), dt),
        grid_spec=pltpu.PrefetchScalarGridSpec(
            num_scalar_prefetch=0,
            grid=grid,
            in_specs=[
                pl.BlockSpec((None, block_n, D), lambda b, n: (b, n, 0)),    # x
                pl.BlockSpec((None, 1, D),       lambda b, n: (b, 0, 0)),    # shift
                pl.BlockSpec((None, 1, D),       lambda b, n: (b, 0, 0)),    # scale
                pl.BlockSpec((D, C_pad),         lambda b, n: (0, 0)),       # w_fused
                pl.BlockSpec((1, C_pad),         lambda b, n: (0, 0)),       # b_fused
            ],
            out_specs=pl.BlockSpec((None, block_n, C_pad),
                                   lambda b, n: (b, n, 0)),
        ),
        compiler_params=pltpu.CompilerParams(
            dimension_semantics=("parallel", "parallel"),
            vmem_limit_bytes=vmem_limit),
    )(x, shift, scale, w_fused, b_fused)

    return out_padded[..., :C]


# ------------------------ plain-JAX reference (check) ------------------------

def final_layer_ref(x, c, params):
    mu = x.mean(-1, keepdims=True)
    var = ((x - mu) ** 2).mean(-1, keepdims=True)
    xn = (x - mu) / jnp.sqrt(var + 1e-6)

    c_silu = c * jax.nn.sigmoid(c)
    ada = c_silu @ params["w_ada"] + params["b_ada"][0]           # (B, 2D)
    shift, scale = jnp.split(ada, 2, axis=-1)

    xm = xn * (1.0 + scale[:, None, :]) + shift[:, None, :]
    h = xm @ params["w1"] + params["b1"][0]
    return h @ params["w2"] + params["b2"][0]


# ---------------------------------- main -------------------------------------

if __name__ == "__main__":
    B, N = 2, 8                 # batch, sequence
    hidden_size = 32            # D
    out_channels = 16           # C
    inter = 32                  # fixed by the module: Linear(hidden_size, 32)

    key = jax.random.PRNGKey(0)
    ks = jax.random.split(key, 8)

    def init(k, shape, scale=0.02):
        return (scale * jax.random.normal(k, shape)).astype(jnp.float32)

    x = jax.random.normal(ks[0], (B, N, hidden_size), dtype=jnp.float32)
    c = jax.random.normal(ks[1], (B, hidden_size), dtype=jnp.float32)

    params = {
        # adaLN_modulation: SiLU() then Linear(D, 2D) with bias
        "w_ada": init(ks[2], (hidden_size, 2 * hidden_size)),
        "b_ada": init(ks[3], (1, 2 * hidden_size), scale=0.01),
        # linear: Linear(D, 32) -> Linear(32, out_channels), both with bias
        "w1":    init(ks[4], (hidden_size, inter)),
        "b1":    init(ks[5], (1, inter), scale=0.01),
        "w2":    init(ks[6], (inter, out_channels)),
        "b2":    init(ks[7], (1, out_channels), scale=0.01),
    }

    out = final_layer(x, c, params)
    out = jax.block_until_ready(out)

    ref = final_layer_ref(x, c, params)
    assert out.shape == (B, N, out_channels)
    err = float(jnp.max(jnp.abs(out - ref)))
    assert jnp.allclose(out, ref, atol=1e-4, rtol=1e-4), err

    print("KERNEL_OK")
</pallas_src>

<mosaic_0001>
module attributes {stable_mosaic.version = 11 : i64} {
  func.func @_final_layer_kernel(%arg0: i32, %arg1: i32, %arg2: memref<1x8x32xf32, #tpu.memory_space<vmem>>, %arg3: memref<1x1x32xf32, #tpu.memory_space<vmem>>, %arg4: memref<1x1x32xf32, #tpu.memory_space<vmem>>, %arg5: memref<32x128xf32, #tpu.memory_space<vmem>>, %arg6: memref<1x128xf32, #tpu.memory_space<vmem>>, %arg7: memref<1x8x128xf32, #tpu.memory_space<vmem>>) attributes {dimension_semantics = [#tpu.dimension_semantics<parallel>, #tpu.dimension_semantics<parallel>], iteration_bounds = array<i64: 2, 1>, scalar_prefetch = 0 : i64, scratch_operands = 0 : i64, tpu.core_type = #tpu.core_type<tc>, window_params = [{transform_indices = @transform_0, window_bounds = array<i64: 1, 8, 32>}, {transform_indices = @transform_1, window_bounds = array<i64: 1, 1, 32>}, {transform_indices = @transform_2, window_bounds = array<i64: 1, 1, 32>}, {pipeline_mode = #tpu.pipeline_mode<synchronous>, transform_indices = @transform_3, window_bounds = array<i64: 32, 128>}, {pipeline_mode = #tpu.pipeline_mode<synchronous>, transform_indices = @transform_4, window_bounds = array<i64: 1, 128>}, {transform_indices = @transform_5, window_bounds = array<i64: 1, 8, 128>}]} {
    %c0 = arith.constant 0 : index
    %c0_0 = arith.constant 0 : index
    %c0_1 = arith.constant 0 : index
    %0 = vector.load %arg2[%c0, %c0_0, %c0_1] : memref<1x8x32xf32, #tpu.memory_space<vmem>>, vector<1x8x32xf32>
    %1 = vector.shape_cast %0 : vector<1x8x32xf32> to vector<8x32xf32>
    %c0_2 = arith.constant 0 : index
    %c0_3 = arith.constant 0 : index
    %c0_4 = arith.constant 0 : index
    %2 = vector.load %arg3[%c0_2, %c0_3, %c0_4] : memref<1x1x32xf32, #tpu.memory_space<vmem>>, vector<1x1x32xf32>
    %3 = vector.shape_cast %2 : vector<1x1x32xf32> to vector<1x32xf32>
    %c0_5 = arith.constant 0 : index
    %c0_6 = arith.constant 0 : index
    %c0_7 = arith.constant 0 : index
    %4 = vector.load %arg4[%c0_5, %c0_6, %c0_7] : memref<1x1x32xf32, #tpu.memory_space<vmem>>, vector<1x1x32xf32>
    %5 = vector.shape_cast %4 : vector<1x1x32xf32> to vector<1x32xf32>
    %cst = arith.constant dense<0.000000e+00> : vector<8xf32>
    %6 = vector.multi_reduction <add>, %1, %cst [1] : vector<8x32xf32> to vector<8xf32>
    %7 = vector.shape_cast %6 : vector<8xf32> to vector<8x1xf32>
    %cst_8 = arith.constant 3.200000e+01 : f32
    %8 = vector.broadcast %cst_8 : f32 to vector<8x1xf32>
    %9 = arith.divf %7, %8 : vector<8x1xf32>
    %10 = arith.mulf %1, %1 : vector<8x32xf32>
    %cst_9 = arith.constant dense<0.000000e+00> : vector<8xf32>
    %11 = vector.multi_reduction <add>, %10, %cst_9 [1] : vector<8x32xf32> to vector<8xf32>
    %12 = vector.shape_cast %11 : vector<8xf32> to vector<8x1xf32>
    %cst_10 = arith.constant 3.200000e+01 : f32
    %13 = vector.broadcast %cst_10 : f32 to vector<8x1xf32>
    %14 = arith.divf %12, %13 : vector<8x1xf32>
    %15 = arith.mulf %9, %9 : vector<8x1xf32>
    %16 = arith.subf %14, %15 : vector<8x1xf32>
    %17 = vector.broadcast %9 : vector<8x1xf32> to vector<8x32xf32>
    %18 = arith.subf %1, %17 : vector<8x32xf32>
    %cst_11 = arith.constant 9.99999997E-7 : f32
    %19 = vector.broadcast %cst_11 : f32 to vector<8x1xf32>
    %20 = arith.addf %16, %19 : vector<8x1xf32>
    %21 = math.rsqrt %20 : vector<8x1xf32>
    %22 = vector.broadcast %21 : vector<8x1xf32> to vector<8x32xf32>
    %23 = arith.mulf %18, %22 : vector<8x32xf32>
    %cst_12 = arith.constant 1.000000e+00 : f32
    %24 = vector.broadcast %cst_12 : f32 to vector<1x32xf32>
    %25 = arith.addf %24, %5 : vector<1x32xf32>
    %26 = vector.broadcast %25 : vector<1x32xf32> to vector<8x32xf32>
    %27 = arith.mulf %23, %26 : vector<8x32xf32>
    %28 = vector.broadcast %3 : vector<1x32xf32> to vector<8x32xf32>
    %29 = arith.addf %27, %28 : vector<8x32xf32>
    %c0_13 = arith.constant 0 : index
    %c0_14 = arith.constant 0 : index
    %30 = vector.load %arg5[%c0_13, %c0_14] : memref<32x128xf32, #tpu.memory_space<vmem>>, vector<32x128xf32>
    %cst_15 = arith.constant dense<0.000000e+00> : vector<8x128xf32>
    %31 = tpu.matmul %29, %30, %cst_15 {dimension_numbers = #tpu.dot_dimension_numbers<[1], [0], [0], [1], [0, 0, 1, 1], [], []>} : vector<8x32xf32>, vector<32x128xf32>, vector<8x128xf32> -> vector<8x128xf32>
    %c0_16 = arith.constant 0 : index
    %c0_17 = arith.constant 0 : index
    %32 = vector.load %arg6[%c0_16, %c0_17] : memref<1x128xf32, #tpu.memory_space<vmem>>, vector<1x128xf32>
    %33 = vector.broadcast %32 : vector<1x128xf32> to vector<8x128xf32>
    %34 = arith.addf %31, %33 : vector<8x128xf32>
    %c0_18 = arith.constant 0 : index
    %c0_19 = arith.constant 0 : index
    %c0_20 = arith.constant 0 : index
    %35 = vector.load %arg7[%c0_18, %c0_19, %c0_20] : memref<1x8x128xf32, #tpu.memory_space<vmem>>, vector<1x8x128xf32>
    %36 = vector.shape_cast %35 : vector<1x8x128xf32> to vector<8x128xf32>
    %37 = vector.shape_cast %34 : vector<8x128xf32> to vector<1x8x128xf32>
    tpu.vector_store %arg7[%c0_18, %c0_19, %c0_20], %37 {strides = array<i32>} : memref<1x8x128xf32, #tpu.memory_space<vmem>>, vector<1x8x128xf32>,
    return
  }
  func.func @transform_0(%arg0: i32, %arg1: i32) -> (i32, i32, i32) {
    %c0_i32 = arith.constant 0 : i32
    %c0_i32_0 = arith.constant 0 : i32
    return %arg0, %arg1, %c0_i32 : i32, i32, i32
  }
  func.func @transform_1(%arg0: i32, %arg1: i32) -> (i32, i32, i32) {
    %c0_i32 = arith.constant 0 : i32
    %c0_i32_0 = arith.constant 0 : i32
    %c0_i32_1 = arith.constant 0 : i32
    return %arg0, %c0_i32, %c0_i32_0 : i32, i32, i32
  }
  func.func @transform_2(%arg0: i32, %arg1: i32) -> (i32, i32, i32) {
    %c0_i32 = arith.constant 0 : i32
    %c0_i32_0 = arith.constant 0 : i32
    %c0_i32_1 = arith.constant 0 : i32
    return %arg0, %c0_i32, %c0_i32_0 : i32, i32, i32
  }
  func.func @transform_3(%arg0: i32, %arg1: i32) -> (i32, i32) {
    %c0_i32 = arith.constant 0 : i32
    %c0_i32_0 = arith.constant 0 : i32
    %c0_i32_1 = arith.constant 0 : i32
    return %c0_i32, %c0_i32_0 : i32, i32
  }
  func.func @transform_4(%arg0: i32, %arg1: i32) -> (i32, i32) {
    %c0_i32 = arith.constant 0 : i32
    %c0_i32_0 = arith.constant 0 : i32
    %c0_i32_1 = arith.constant 0 : i32
    return %c0_i32, %c0_i32_0 : i32, i32
  }
  func.func @transform_5(%arg0: i32, %arg1: i32) -> (i32, i32, i32) {
    %c0_i32 = arith.constant 0 : i32
    %c0_i32_0 = arith.constant 0 : i32
    return %arg0, %arg1, %c0_i32 : i32, i32, i32
  }
}

</mosaic_0001>

<llo_original>
// kernel: tpu_custom_call.1
$region0: #{tpu_custom_call.1}
  #allocation0 [shape = 'u32[]', space=smem, size = 0x4, offset = 0x4, fixed_abs, tag = 'smem constant byte address 0x4 - core index']
  #allocation1 [shape = 'u32[144,128]{1,0:T(1,128)}', space=vmem, size = 0x12000, scoped, tag = 'internal scratch']
  %s0 = inlined_call_operand.hbm [shape: f32[2,8,32], index: 0, kind: input, shape index: {}]
  %s1 = inlined_call_operand.hbm [shape: f32[2,1,32], index: 1, kind: input, shape index: {}]
  %s2 = inlined_call_operand.vmem [shape: f32[2,1,32], index: 2, kind: input, shape index: {}]
  %s3 = inlined_call_operand.hbm [shape: f32[32,128], index: 3, kind: input, shape index: {}]
  %s4 = inlined_call_operand.vmem [shape: f32[1,128], index: 4, kind: input, shape index: {}]
  %s5 = inlined_call_operand.hbm [shape: f32[2,8,128], index: 5, kind: output, shape index: {}]
  %s6 = sld [smem:[#allocation0]]
  $region65: #{tpu_custom_call.1} parent=0
    _
  %s8 = ssub.s32 1, %s6
  %s9 = scalar_select 0, %s8, %s6
  $region1: #{tpu_custom_call.1} parent=0
    #allocation2 [shape = 'u8[8192]{0}', space=vmem, size = 0x2000, scoped, tag = 'input window, operand 0']
    #allocation3 [shape = 's32[2]{0}', space=sflag, size = 0x8, scoped, tag = 'scoped memory for tpu_custom_call.1']
    #allocation4 [shape = 's32[2]{0}', space=sflag, size = 0x8, scoped, tag = 'scoped memory for tpu_custom_call.1']
    #allocation5 [shape = 'u8[1024]{0}', space=vmem, size = 0x400, scoped, tag = 'input window, operand 1']
    #allocation6 [shape = 's32[2]{0}', space=sflag, size = 0x8, scoped, tag = 'scoped memory for tpu_custom_call.1']
    #allocation7 [shape = 'u8[16384]{0}', space=vmem, size = 0x4000, scoped, tag = 'input window, operand 3, single buffered']
    #allocation8 [shape = 'u8[8192]{0}', space=vmem, size = 0x2000, scoped, tag = 'output window, operand 0']
    %10 = vsyncpa [#allocation3], 0
    %s11 = scalar_lea.sflag [#allocation3], 1
    %12 = vsyncpa %s11, 0
    %13 = vsyncpa [#allocation6], 0
    %s14 = scalar_lea.sflag [#allocation6], 1
    %15 = vsyncpa %s14, 0
    %16 = vsyncpa [#allocation4], 0
    %s17 = scalar_lea.sflag [#allocation4], 1
    %18 = vsyncpa %s17, 0
    loop: start=0, step=1, limit=4
    $region2: #{tpu_custom_call.1} parent=1 // loop_pre_header
      _
    $region3: #{tpu_custom_call.1} parent=1 // loop_header
      %s20 = sphi 0, %s24
      %p21 = scmp.ge.s32.totalorder %s20, 4
      %s27 = sphi 0, %s39
      %s28 = sphi 0, %s35
      %s29 = sphi 0, %s27
      %s30 = sphi 0, %s28
      %s31 = sphi 0, %s29
      %s32 = sphi 0, %s30
      %s44 = sphi 0, %s46
      %s47 = sphi 0, %s44
      %s48 = sphi 0, %s47
      %s64 = sphi 0, %s48
      %s70 = sphi 0, %s72
      %s73 = sphi 0, %s70
      %s74 = sphi 0, %s73
      %s90 = sphi 0, %s74
      %s96 = sphi 0, %s98
      %s99 = sphi 0, %s96
      %s100 = sphi 0, %s99
      %s116 = sphi 0, %s100
      %s120 = sphi 0, %s120
      %s122 = sphi 0, %s120
      %s123 = sphi 0, %s122
      %s137 = sphi 0, %s123
      %s141 = sphi 0, %s141
      %s143 = sphi 0, %s141
      %s144 = sphi 0, %s143
      %s158 = sphi 0, %s144
      %s166 = sphi 0, %s168
      %s169 = sphi 0, %s166
      %s170 = sphi 0, %s169
      %s186 = sphi 0, %s170
    $region4: #{tpu_custom_call.1} parent=1 // loop_header_branch
      %23 = sbr.rel (%p21) target = $region8
    $region5: #{tpu_custom_call.1} parent=1 // loop_body
      %s25 = ssub.s32 %s20, 1
      %s26 = ssub.s32 %s20, 2
      %s33 = sadd.s32 1, %s28
      %p34 = scmp.ge.s32.totalorder %s33, 1
      %s35 = scalar_select %p34, 0, %s33
      %s36 = sadd.s32 1, %s27
      %s37 = scalar_select %p34, %s36, %s27
      %p38 = scmp.ge.s32.totalorder %s37, 2
      %s39 = scalar_select %p38, 0, %s37
      %s40 = ssub.s32 %s27, %s39
      %s41 = ssub.s32 %s28, %s35
      %s42 = sor.u32 %s40, %s41
      %p43 = scmp.eq.s32.totalorder %s42, 0
      %s45 = sadd.s32 %s44, 1
      %s46 = scalar_select %p43, %s44, %s45
      %p49 = pneg %p43
      %p50 = scmp.eq.s32.totalorder %s20, 1
      %p51 = por %p49, %p50
      %p52 = scmp.ne.s32.totalorder %s44, %s47
      %p53 = scmp.eq.s32.totalorder %s20, 0
      %p54 = por %p52, %p53
      %p55 = scmp.ne.s32.totalorder %s44, %s47
      %p56 = scmp.eq.s32.totalorder %s25, 1
      %p57 = por %p55, %p56
      %p58 = scmp.ne.s32.totalorder %s47, %s48
      %p59 = scmp.eq.s32.totalorder %s25, 0
      %p60 = por %p58, %p59
      %p61 = scmp.ne.s32.totalorder %s47, %s48
      %p62 = scmp.eq.s32.totalorder %s26, 1
      %p63 = por %p61, %p62
      %p65 = scmp.ne.s32.totalorder %s48, %s64
      %p66 = scmp.eq.s32.totalorder %s26, 0
      %p67 = por %p65, %p66
      %s68 = ssub.s32 %s27, %s39
      %p69 = scmp.eq.s32.totalorder %s68, 0
      %s71 = sadd.s32 %s70, 1
      %s72 = scalar_select %p69, %s70, %s71
      %p75 = pneg %p69
      %p76 = scmp.eq.s32.totalorder %s20, 1
      %p77 = por %p75, %p76
      %p78 = scmp.ne.s32.totalorder %s70, %s73
      %p79 = scmp.eq.s32.totalorder %s20, 0
      %p80 = por %p78, %p79
      %p81 = scmp.ne.s32.totalorder %s70, %s73
      %p82 = scmp.eq.s32.totalorder %s25, 1
      %p83 = por %p81, %p82
      %p84 = scmp.ne.s32.totalorder %s73, %s74
      %p85 = scmp.eq.s32.totalorder %s25, 0
      %p86 = por %p84, %p85
      %p87 = scmp.ne.s32.totalorder %s73, %s74
      %p88 = scmp.eq.s32.totalorder %s26, 1
      %p89 = por %p87, %p88
      %p91 = scmp.ne.s32.totalorder %s74, %s90
      %p92 = scmp.eq.s32.totalorder %s26, 0
      %p93 = por %p91, %p92
      %s94 = ssub.s32 %s27, %s39
      %p95 = scmp.eq.s32.totalorder %s94, 0
      %s97 = sadd.s32 %s96, 1
      %s98 = scalar_select %p95, %s96, %s97
      %p101 = pneg %p95
      %p102 = scmp.eq.s32.totalorder %s20, 1
      %p103 = por %p101, %p102
      %p104 = scmp.ne.s32.totalorder %s96, %s99
      %p105 = scmp.eq.s32.totalorder %s20, 0
      %p106 = por %p104, %p105
      %p107 = scmp.ne.s32.totalorder %s96, %s99
      %p108 = scmp.eq.s32.totalorder %s25, 1
      %p109 = por %p107, %p108
      %p110 = scmp.ne.s32.totalorder %s99, %s100
      %p111 = scmp.eq.s32.totalorder %s25, 0
      %p112 = por %p110, %p111
      %p113 = scmp.ne.s32.totalorder %s99, %s100
      %p114 = scmp.eq.s32.totalorder %s26, 1
      %p115 = por %p113, %p114
      %p117 = scmp.ne.s32.totalorder %s100, %s116
      %p118 = scmp.eq.s32.totalorder %s26, 0
      %p119 = por %p117, %p118
      %s121 = sadd.s32 %s120, 1
      %p124 = scmp.eq.s32.totalorder %s20, 1
      %p125 = scmp.ne.s32.totalorder %s120, %s122
      %p126 = scmp.eq.s32.totalorder %s20, 0
      %p127 = por %p125, %p126
      %p128 = scmp.ne.s32.totalorder %s120, %s122
      %p129 = scmp.eq.s32.totalorder %s25, 1
      %p130 = por %p128, %p129
      %p131 = scmp.ne.s32.totalorder %s122, %s123
      %p132 = scmp.eq.s32.totalorder %s25, 0
      %p133 = por %p131, %p132
      %p134 = scmp.ne.s32.totalorder %s122, %s123
      %p135 = scmp.eq.s32.totalorder %s26, 1
      %p136 = por %p134, %p135
      %p138 = scmp.ne.s32.totalorder %s123, %s137
      %p139 = scmp.eq.s32.totalorder %s26, 0
      %p140 = por %p138, %p139
      %s142 = sadd.s32 %s141, 1
      %p145 = scmp.eq.s32.totalorder %s20, 1
      %p146 = scmp.ne.s32.totalorder %s141, %s143
      %p147 = scmp.eq.s32.totalorder %s20, 0
      %p148 = por %p146, %p147
      %p149 = scmp.ne.s32.totalorder %s141, %s143
      %p150 = scmp.eq.s32.totalorder %s25, 1
      %p151 = por %p149, %p150
      %p152 = scmp.ne.s32.totalorder %s143, %s144
      %p153 = scmp.eq.s32.totalorder %s25, 0
      %p154 = por %p152, %p153
      %p155 = scmp.ne.s32.totalorder %s143, %s144
      %p156 = scmp.eq.s32.totalorder %s26, 1
      %p157 = por %p155, %p156
      %p159 = scmp.ne.s32.totalorder %s144, %s158
      %p160 = scmp.eq.s32.totalorder %s26, 0
      %p161 = por %p159, %p160
      %s162 = ssub.s32 %s27, %s39
      %s163 = ssub.s32 %s28, %s35
      %s164 = sor.u32 %s162, %s163
      %p165 = scmp.eq.s32.totalorder %s164, 0
      %s167 = sadd.s32 %s166, 1
      %s168 = scalar_select %p165, %s166, %s167
      %p171 = pneg %p165
      %p172 = scmp.eq.s32.totalorder %s20, 1
      %p173 = por %p171, %p172
      %p174 = scmp.ne.s32.totalorder %s166, %s169
      %p175 = scmp.eq.s32.totalorder %s20, 0
      %p176 = por %p174, %p175
      %p177 = scmp.ne.s32.totalorder %s166, %s169
      %p178 = scmp.eq.s32.totalorder %s25, 1
      %p179 = por %p177, %p178
      %p180 = scmp.ne.s32.totalorder %s169, %s170
      %p181 = scmp.eq.s32.totalorder %s25, 0
      %p182 = por %p180, %p181
      %p183 = scmp.ne.s32.totalorder %s169, %s170
      %p184 = scmp.eq.s32.totalorder %s26, 1
      %p185 = por %p183, %p184
      %p187 = scmp.ne.s32.totalorder %s170, %s186
      %p188 = scmp.eq.s32.totalorder %s26, 0
      %p189 = por %p187, %p188
      %p190 = scmp.le.s32.totalorder 1, %s20
      %p191 = scmp.lt.s32.totalorder %s20, 3
      %p192 = pnand %p190, %p191
      %p193 = pneg %p192
      // Predicated region
      $region9: #{tpu_custom_call.1} parent=5 // pred_check
        _
      $region10: #{tpu_custom_call.1} parent=5 // pred_check_branch
        %195 = sbr.rel (%p192) target = $region12
      $region11: #{tpu_custom_call.1} parent=5 // pred_region
        %s196 = ssub.s32 %s20, 1
        // Predicated region
        $region13: #{tpu_custom_call.1} parent=11 // pred_check
          %p197 = pneg %p133
        $region14: #{tpu_custom_call.1} parent=11 // pred_check_branch
          %199 = sbr.rel (%p197) target = $region16
        $region15: #{tpu_custom_call.1} parent=11 // pred_region
          %s201 = ssub.s32 512, 512
          %202 = vsyncadd [#allocation6], %s201
          %s203 = sshll.u32 [#allocation7], 4
          %s204 = int_to_ptr.vmem [resolvable:$true] %s203
          %209 = dma.hbm_to_vmem [thread:$0]  %s3, 512, %s204, [#allocation6], 128, 128, 8
        $region16: #{tpu_custom_call.1} parent=11 // pred_fallthru
          _
        // Predicated region
        $region17: #{tpu_custom_call.1} parent=11 // pred_check
          %p210 = pneg %p154
        $region18: #{tpu_custom_call.1} parent=11 // pred_check_branch
          %212 = sbr.rel (%p210) target = $region20
        $region19: #{tpu_custom_call.1} parent=11 // pred_region
          _
        $region20: #{tpu_custom_call.1} parent=11 // pred_fallthru
          _
      $region12: #{tpu_custom_call.1} parent=5 // pred_fallthru
        _
      %p213 = scmp.lt.s32.totalorder %s20, 2
      // Predicated region
      $region21: #{tpu_custom_call.1} parent=5 // pred_check
        %p214 = pneg %p213
      $region22: #{tpu_custom_call.1} parent=5 // pred_check_branch
        %216 = sbr.rel (%p214) target = $region24
      $region23: #{tpu_custom_call.1} parent=5 // pred_region
        // Predicated region
        $region25: #{tpu_custom_call.1} parent=23 // pred_check
          %p217 = pneg %p54
        $region26: #{tpu_custom_call.1} parent=23 // pred_check_branch
          %219 = sbr.rel (%p217) target = $region28
        $region27: #{tpu_custom_call.1} parent=23 // pred_region
          %s220 = sand.u32 %s44, 1
          %s221 = scalar_lea.sflag [#allocation3], %s220
          %s222 = sand.u32 %s44, 1
          %s223 = smul.addr %s222, 8
          %s224 = scalar_lea.vmem [#allocation2], %s223
          %s226 = ssub.s32 128, 128
          %227 = vsyncadd %s221, %s226
          %s228 = sadd.s32 %s28, %s27
          %s229 = smul.addr %s228, 128
          %s230 = scalar_lea.hbm %s0, %s229
          %s232 = sshll.u32 %s224, 4
          %s233 = int_to_ptr.vmem [resolvable:$true] %s232
          %235 = dma.hbm_to_vmem [thread:$0]  %s230, 128, %s233, %s221
        $region28: #{tpu_custom_call.1} parent=23 // pred_fallthru
          _
        // Predicated region
        $region29: #{tpu_custom_call.1} parent=23 // pred_check
          %p236 = pneg %p80
        $region30: #{tpu_custom_call.1} parent=23 // pred_check_branch
          %238 = sbr.rel (%p236) target = $region32
        $region31: #{tpu_custom_call.1} parent=23 // pred_region
          %s239 = sand.u32 %s20, 1
          %s240 = scalar_lea.sflag [#allocation6], %s239
          %s241 = sand.u32 %s70, 1
          %s242 = scalar_lea.vmem [#allocation5], %s241
          %s244 = ssub.s32 16, 16
          %245 = vsyncadd %s240, %s244
          %s246 = smul.addr %s27, 16
          %s247 = scalar_lea.hbm %s1, %s246
          %s249 = sshll.u32 %s242, 4
          %s250 = int_to_ptr.vmem [resolvable:$true] %s249
          %252 = dma.hbm_to_vmem [thread:$0]  %s247, 16, %s250, %s240
        $region32: #{tpu_custom_call.1} parent=23 // pred_fallthru
          _
        // Predicated region
        $region33: #{tpu_custom_call.1} parent=23 // pred_check
          %p253 = pneg %p106
        $region34: #{tpu_custom_call.1} parent=23 // pred_check_branch
          %255 = sbr.rel (%p253) target = $region36
        $region35: #{tpu_custom_call.1} parent=23 // pred_region
          %p256 = scmp.lt.s32.totalorder %s27, 1
          %s257 = scalar_select %p256, %s27, 1
          %s258 = scalar_lea.vmem %s2, %s257
        $region36: #{tpu_custom_call.1} parent=23 // pred_fallthru
          _
      $region24: #{tpu_custom_call.1} parent=5 // pred_fallthru
        _
      %p259 = scmp.le.s32.totalorder 1, %s20
      %p260 = scmp.lt.s32.totalorder %s20, 3
      %p261 = pnand %p259, %p260
      %p262 = pneg %p261
      // Predicated region
      $region37: #{tpu_custom_call.1} parent=5 // pred_check
        _
      $region38: #{tpu_custom_call.1} parent=5 // pred_check_branch
        %264 = sbr.rel (%p261) target = $region40
      $region39: #{tpu_custom_call.1} parent=5 // pred_region
        %s265 = ssub.s32 %s20, 1
        %s266 = sand.u32 %s47, 1
        %s267 = scalar_lea.sflag [#allocation3], %s266
        %s268 = sand.u32 %s47, 1
        %s269 = smul.addr %s268, 8
        %s270 = scalar_lea.vmem [#allocation2], %s269
        // Predicated region
        $region41: #{tpu_custom_call.1} parent=39 // pred_check
          %p271 = pneg %p60
        $region42: #{tpu_custom_call.1} parent=39 // pred_check_branch
          %273 = sbr.rel (%p271) target = $region44
        $region43: #{tpu_custom_call.1} parent=39 // pred_region
          %274 = dma.done %s267, 128
        $region44: #{tpu_custom_call.1} parent=39 // pred_fallthru
          _
        %s275 = sand.u32 %s25, 1
        %s276 = scalar_lea.sflag [#allocation6], %s275
        %s277 = sand.u32 %s73, 1
        %s278 = scalar_lea.vmem [#allocation5], %s277
        // Predicated region
        $region45: #{tpu_custom_call.1} parent=39 // pred_check
          %p279 = pneg %p86
        $region46: #{tpu_custom_call.1} parent=39 // pred_check_branch
          %281 = sbr.rel (%p279) target = $region48
        $region47: #{tpu_custom_call.1} parent=39 // pred_region
          %282 = dma.done %s276, 16
        $region48: #{tpu_custom_call.1} parent=39 // pred_fallthru
          _
        // Predicated region
        $region49: #{tpu_custom_call.1} parent=39 // pred_check
          %p283 = pneg %p133
        $region50: #{tpu_custom_call.1} parent=39 // pred_check_branch
          %285 = sbr.rel (%p283) target = $region52
        $region51: #{tpu_custom_call.1} parent=39 // pred_region
          %286 = dma.done [#allocation6], 512
        $region52: #{tpu_custom_call.1} parent=39 // pred_fallthru
          _
        %s287 = sand.u32 %s47, 1
        %s288 = scalar_lea.sflag [#allocation3], %s287
        %s289 = sand.u32 %s47, 1
        %s290 = smul.addr %s289, 8
        %s291 = scalar_lea.vmem [#allocation2], %s290
        %p292 = pneg %p60
        %p293 = pneg %p57
        %s294 = sand.u32 %s25, 1
        %s295 = scalar_lea.sflag [#allocation6], %s294
        %s296 = sand.u32 %s73, 1
        %s297 = scalar_lea.vmem [#allocation5], %s296
        %p298 = pneg %p86
        %p299 = pneg %p83
        %p300 = scmp.lt.s32.totalorder %s29, 1
        %s301 = scalar_select %p300, %s29, 1
        %s302 = scalar_lea.vmem %s2, %s301
        %p303 = pneg %p112
        %p304 = pneg %p109
        %p305 = pneg %p133
        %p306 = pneg %p130
        %p307 = pneg %p154
        %p308 = pneg %p151
        %p309 = pneg %p182
        %p310 = pneg %p179
        %s311 = sand.u32 %s169, 1
        %s312 = scalar_lea.sflag [#allocation4], %s311
        %s313 = sand.u32 %s169, 1
        %s314 = smul.addr %s313, 8
        %s315 = scalar_lea.vmem [#allocation8], %s314
        %p316 = scmp.lt.s32.totalorder %s29, 1
        %s317 = scalar_select %p316, %s29, 1
        %s318 = scalar_lea.vmem %s2, %s317
        %v319 = vld [vmem:[%s270] sm:$0xff]
        %v320 = vld [vmem:[%s278] sm:$0x1]
        %v321 = vld [vmem:[%s318] sm:$0x1]
        %vm322 = vcmask 261120
        %v323 = vsel %vm322, %v319, 0.0
        %324 = vadd.xlane.f32.xlu0 %v323
        %v325 = vpop.xlane.xlu0 %324
        %v326 = vrcp.pop 32.0
        %v327 = vmul.f32 %v325, %v326
        %v328 = vmul.f32 %v319, %v319
        %v329 = vsel %vm322, %v328, 0.0
        %330 = vadd.xlane.f32.xlu0 %v329
        %v331 = vpop.xlane.xlu0 %330
        %v332 = vmul.f32 %v331, %v326
        %v333 = vmul.f32 %v327, %v327
        %v334 = vsub.f32 %v332, %v333
        %v335 = vsub.f32 %v319, %v327
        %v336 = vadd.f32 %v334, 1e-06
        %v337 = vrsqrt.pop %v336
        %v338 = vmul.f32 %v335, %v337
        %v339 = vadd.f32 %v321, 1.0
        %v341 = vlaneseq
        %v342 = vshrl.u32 %v341, 7
        %v343 = vsub.s32 0, %v342
        %v344 = vrot.slane %v339, %v343
        %v346 = vmul.f32 %v338, %v344
        %v348 = vlaneseq
        %v349 = vshrl.u32 %v348, 7
        %v350 = vsub.s32 0, %v349
        %v351 = vrot.slane %v320, %v350
        %v353 = vadd.f32 %v346, %v351
        %v354 = vld [vmem:[#allocation7] sm:$0xff]
        %v355 = vld [vmem:[#allocation7 + $0x8] sm:$0xff]
        %v356 = vld [vmem:[#allocation7 + $0x10] sm:$0xff]
        %v357 = vld [vmem:[#allocation7 + $0x18] sm:$0xff]
        %v358 = vld [vmem:[%s4] sm:$0x1]
        %v360 = vlaneseq
        %v361 = vshrl.u32 %v360, 7
        %v362 = vsub.s32 0, %v361
        %v363 = vrot.slane %v358, %v362
        %v366 = vsel %vm322, %v353, 0
        %368 = vmatprep.subr.mxu0 0.0
        %369 = vmatpush1.msra.mxu0 0.0
        %370 = vmatprep.subr.mxu0 0.0
        %371 = vmatpush1.msra.mxu0 0.0
        %372 = vmatprep.subr.mxu0 0.0
        %373 = vmatpush1.msra.mxu0 0.0
        %374 = vmatprep.subr.mxu0 0.0
        %375 = vmatpush1.msra.mxu0 0.0
        %376 = vmatprep.subr.mxu0 0.0
        %377 = vmatpush1.msra.mxu0 0.0
        %378 = vmatprep.subr.mxu0 0.0
        %379 = vmatpush1.msra.mxu0 0.0
        %380 = vmatprep.subr.mxu0 0.0
        %381 = vmatpush1.msra.mxu0 0.0
        %382 = vmatprep.subr.mxu0 0.0
        %383 = vmatpush1.msra.mxu0 0.0
        %384 = vmatprep.subr.mxu0 0.0
        %385 = vmatpush1.msra.mxu0 0.0
        %386 = vmatprep.subr.mxu0 0.0
        %387 = vmatpush1.msra.mxu0 0.0
        %388 = vmatprep.subr.mxu0 0.0
        %389 = vmatpush1.msra.mxu0 0.0
        %390 = vmatprep.subr.mxu0 0.0
        %391 = vmatpush1.msra.mxu0 0.0
        %392 = vmatprep.subr.mxu0 0.0
        %393 = vmatpush1.msra.mxu0 %v357
        %394 = vmatprep.subr.mxu0 0.0
        %395 = vmatpush1.msra.mxu0 %v356
        %396 = vmatprep.subr.mxu0 0.0
        %397 = vmatpush1.msra.mxu0 %v355
        %398 = vmatprep.subr.mxu0 0.0
        %399 = vmatpush1.msra.mxu0 %v354
        %400 = vmatprep.subr.mxu0 0.0
        %401 = vmatpush2.msra.mxu0 0.0
        %402 = vmatprep.subr.mxu0 0.0
        %403 = vmatpush2.msra.mxu0 0.0
        %404 = vmatprep.subr.mxu0 0.0
        %405 = vmatpush2.msra.mxu0 0.0
        %406 = vmatprep.subr.mxu0 0.0
        %407 = vmatpush2.msra.mxu0 0.0
        %408 = vmatprep.subr.mxu0 0.0
        %409 = vmatpush2.msra.mxu0 0.0
        %410 = vmatprep.subr.mxu0 0.0
        %411 = vmatpush2.msra.mxu0 0.0
        %412 = vmatprep.subr.mxu0 0.0
        %413 = vmatpush2.msra.mxu0 0.0
        %414 = vmatprep.subr.mxu0 0.0
        %415 = vmatpush2.msra.mxu0 0.0
        %416 = vmatprep.subr.mxu0 0.0
        %417 = vmatpush2.msra.mxu0 0.0
        %418 = vmatprep.subr.mxu0 0.0
        %419 = vmatpush2.msra.mxu0 0.0
        %420 = vmatprep.subr.mxu0 0.0
        %421 = vmatpush2.msra.mxu0 0.0
        %422 = vmatprep.subr.mxu0 0.0
        %423 = vmatpush2.msra.mxu0 0.0
        %424 = vmatprep.subr.mxu0 0.0
        %425 = vmatpush2.msra.mxu0 0.0
        %426 = vmatprep.subr.mxu0 0.0
        %427 = vmatpush2.msra.mxu0 0.0
        %428 = vmatprep.subr.mxu0 0.0
        %429 = vmatpush2.msra.mxu0 0.0
        %430 = vmatprep.subr.mxu0 0.0
        %431 = vmatpush2.msra.mxu0 0.0
        %432 = vmatprep.mubr.f32.mxu0 0.0
        %433 = vmatmul.mubr.f32.gmra.mxu0 %v366
        %v434 = vpop.f32.mrf.mxu0
        %v435 = vadd.f32 %v363, %v434
        %v436 = vpop.f32.mrf.mxu0
        %437 = vdwg.mxu0
        %438 = vst [vmem:[%s315] sm:$0xff] %v435
        %s439 = sand.u32 %s169, 1
        %s440 = scalar_lea.sflag [#allocation4], %s439
        %s441 = sand.u32 %s169, 1
        %s442 = smul.addr %s441, 8
        %s443 = scalar_lea.vmem [#allocation8], %s442
        // Predicated region
        $region53: #{tpu_custom_call.1} parent=39 // pred_check
          %p444 = pneg %p179
        $region54: #{tpu_custom_call.1} parent=39 // pred_check_branch
          %446 = sbr.rel (%p444) target = $region56
        $region55: #{tpu_custom_call.1} parent=39 // pred_region
          %s448 = ssub.s32 128, 128
          %449 = vsyncadd %s440, %s448
          %s450 = sadd.s32 %s30, %s29
          %s451 = smul.addr %s450, 128
          %s452 = scalar_lea.hbm %s5, %s451
          %s454 = sshll.u32 %s443, 4
          %s455 = int_to_ptr.vmem [resolvable:$true] %s454
          %457 = dma.vmem_to_hbm [thread:$0]  %s455, 128, %s452, %s440
        $region56: #{tpu_custom_call.1} parent=39 // pred_fallthru
          _
      $region40: #{tpu_custom_call.1} parent=5 // pred_fallthru
        _
      %p458 = scmp.le.s32.totalorder 2, %s20
      // Predicated region
      $region57: #{tpu_custom_call.1} parent=5 // pred_check
        %p459 = pneg %p458
      $region58: #{tpu_custom_call.1} parent=5 // pred_check_branch
        %461 = sbr.rel (%p459) target = $region60
      $region59: #{tpu_custom_call.1} parent=5 // pred_region
        %s462 = ssub.s32 %s20, 2
        // Predicated region
        $region61: #{tpu_custom_call.1} parent=59 // pred_check
          %p463 = pneg %p185
        $region62: #{tpu_custom_call.1} parent=59 // pred_check_branch
          %465 = sbr.rel (%p463) target = $region64
        $region63: #{tpu_custom_call.1} parent=59 // pred_region
          %s466 = sand.u32 %s170, 1
          %s467 = scalar_lea.sflag [#allocation4], %s466
          %s468 = sand.u32 %s170, 1
          %s469 = smul.addr %s468, 8
          %s470 = scalar_lea.vmem [#allocation8], %s469
          %471 = dma.done %s467, 128
        $region64: #{tpu_custom_call.1} parent=59 // pred_fallthru
          _
      $region60: #{tpu_custom_call.1} parent=5 // pred_fallthru
        _
    $region6: #{tpu_custom_call.1} parent=1 // loop_footer
      %s24 = sadd.s32 1, %s20
    $region7: #{tpu_custom_call.1} parent=1 // loop_footer_branch
      %19 = sbr.rel target = $region3
    $region8: #{tpu_custom_call.1} parent=1 // loop_exit
      _
    %472 = vsyncpa [#allocation3], 1
    %s473 = scalar_lea.sflag [#allocation3], 1
    %474 = vsyncpa %s473, 1
    %475 = vsyncpa [#allocation6], 1
    %s476 = scalar_lea.sflag [#allocation6], 1
    %477 = vsyncpa %s476, 1
    %478 = vsyncpa [#allocation4], 1
    %s479 = scalar_lea.sflag [#allocation4], 1
    %480 = vsyncpa %s479, 1

</llo_original>
